<compile_context>
chip_gen: v5e
topology: v5e:2x2
jax: 0.10.0
libtpu: 0.0.40
codegen_flags: <defaults>
</compile_context>

<pallas_src>
import functools

import jax
import jax.numpy as jnp
from jax.experimental import pallas as pl
from jax.experimental.pallas import tpu as pltpu

_VMEM_LIMIT = 48 * 1024 * 1024   # <= v7x physical (64 MiB), well under v5e/v6e
_MAX_TILE = 512                  # big tiles amortize the ~0.35us per-step tax


def _round_up(x, m):
    return ((x + m - 1) // m) * m


def _pad2(a, shape):
    return jnp.pad(a, [(0, s - d) for d, s in zip(a.shape, shape)])


def _pick_tiles(n, max_tile=_MAX_TILE):
    """Choose (padded_n, tile_m, tile_k) adapted to the graph size."""
    n_p = _round_up(n, 8)
    if n_p > max_tile:
        n_p = _round_up(n, max_tile)
        tile_k = max_tile
    else:
        tile_k = n_p                      # one column tile; block == full dim
    tile_m = tile_k
    # Keep >= 2 row tiles whenever possible so v7x's two TensorCores both get
    # work on the "parallel" row axis (costs nothing on v5e/v6e).
    if n_p // tile_m < 2 and n_p % 16 == 0:
        tile_m = n_p // 2
    return n_p, tile_m, tile_k


# --------------------------------------------------------------------------
# Graph glue (plain JAX): dense GCN normalization A_hat = D^-1/2 (A+I) D^-1/2,
# built directly at the padded shape and cast to bf16 once.
# Matches PyG gcn_norm: self-loops only added to (real) nodes that lack one.
# Note: duplicate edges accumulate — assumes a coalesced edge_index.
# --------------------------------------------------------------------------
def build_normalized_adjacency(edge_index, num_nodes, padded_nodes=None):
    n_p = num_nodes if padded_nodes is None else padded_nodes
    src, tgt = edge_index[0], edge_index[1]
    m = jnp.zeros((n_p, n_p), jnp.float32).at[tgt, src].add(1.0)
    real = jnp.arange(n_p) < num_nodes
    diag = jnp.diagonal(m)
    m = m + jnp.diag(jnp.where(real & (diag == 0.0), 1.0, 0.0))
    deg = jnp.sum(m, axis=1)
    d_inv_sqrt = jnp.where(deg > 0, 1.0 / jnp.sqrt(deg), 0.0)
    # bf16 A_hat: ~3 significant digits on the 1/sqrt(deg) weights.  Keep f32
    # here (and in the kernels) if bit-closeness to the f32 PyTorch model
    # matters more than HBM traffic.
    return (d_inv_sqrt[:, None] * m * d_inv_sqrt[None, :]).astype(jnp.bfloat16)


def _tile_occupancy(a, tile_m, tile_k):
    """Host-side sparsity metadata for scalar prefetch.

    Returns (cnt[int32, nmt], ids_flat[int32, nmt*max_s], max_s): per row tile
    the number of nonzero column tiles and their (front-packed) ids; padded
    entries repeat the last valid id so skipped steps issue no extra DMA.
    """
    n_p = a.shape[0]
    nmt, nkt = n_p // tile_m, n_p // tile_k
    occ = jnp.any(a.reshape(nmt, tile_m, nkt, tile_k) != 0, axis=(1, 3))
    cnt = jnp.sum(occ, axis=1).astype(jnp.int32)
    max_s = max(int(jnp.max(cnt)), 1)
    order = jnp.argsort((~occ).astype(jnp.int32), axis=1, stable=True)
    ids = order.astype(jnp.int32)[:, :max_s]
    last = jnp.take_along_axis(ids, jnp.maximum(cnt - 1, 0)[:, None], axis=1)
    step = jnp.arange(max_s, dtype=jnp.int32)[None, :]
    ids = jnp.where(step < cnt[:, None], ids, last)
    return cnt, ids.reshape(-1), max_s


# --------------------------------------------------------------------------
# Kernel 1: feature transform  Z1 = X @ W1   (bf16 in, f32 accumulate, bf16 out)
# --------------------------------------------------------------------------
def _feature_transform_kernel(x_ref, w_ref, o_ref):
    o_ref[...] = jnp.dot(
        x_ref[...], w_ref[...], preferred_element_type=jnp.float32
    ).astype(o_ref.dtype)


def _feature_transform(x, w, *, tile_m):
    n, f = x.shape
    h = w.shape[1]
    cost = pl.CostEstimate(
        flops=2 * n * f * h,
        transcendentals=0,
        bytes_accessed=int(n * f * 2 + f * h * 2 + n * h * 2),
    )
    return pl.pallas_call(
        _feature_transform_kernel,
        out_shape=jax.ShapeDtypeStruct((n, h), jnp.bfloat16),
        grid_spec=pltpu.PrefetchScalarGridSpec(
            num_scalar_prefetch=0,
            grid=(n // tile_m,),
            in_specs=[
                pl.BlockSpec((tile_m, f), lambda i: (i, 0)),
                pl.BlockSpec((f, h), lambda i: (0, 0)),   # resident weight
            ],
            out_specs=pl.BlockSpec((tile_m, h), lambda i: (i, 0)),
        ),
        compiler_params=pltpu.CompilerParams(
            dimension_semantics=("parallel",),
            vmem_limit_bytes=_VMEM_LIMIT,
        ),
        cost_estimate=cost,
    )(x, w)


# --------------------------------------------------------------------------
# Kernel 2: fused layer-1 aggregate + layer-2 feature transform
#   Z2 = relu(A_hat @ Z1 + b1) @ W2
# Sparse-tile-aware: grid = (row tiles [parallel], nnz col tiles [arbitrary]).
# Z1 / b1 / W2 are VMEM-resident (constant index_map); A streamed per nnz tile.
# --------------------------------------------------------------------------
def _agg_fused_kernel(cnt_ref, ids_ref, a_ref, z_ref, b_ref, w2_ref, o_ref,
                      acc_ref, *, tile_k, max_s):
    i = pl.program_id(0)
    s = pl.program_id(1)

    @pl.when(s == 0)
    def _():
        acc_ref[...] = jnp.zeros_like(acc_ref)

    @pl.when(s < cnt_ref[i])              # skip padded (all-zero) tile steps
    def _():
        kt = ids_ref[i * max_s + s]
        off = pl.multiple_of(kt * tile_k, tile_k)
        acc_ref[...] += jnp.dot(
            a_ref[...], z_ref[pl.ds(off, tile_k), :],
            preferred_element_type=jnp.float32)

    @pl.when(s == pl.num_programs(1) - 1)
    def _():
        h = jnp.maximum(acc_ref[...] + b_ref[...], 0.0).astype(jnp.bfloat16)
        o_ref[...] = jnp.dot(
            h, w2_ref[...], preferred_element_type=jnp.float32
        ).astype(o_ref.dtype)


def _gcn_aggregate_fused(cnt, ids, a, z, b1, w2, *, tile_m, tile_k, max_s):
    n_p = a.shape[0]
    h_p = z.shape[1]
    o_p = w2.shape[1]
    nnz = int(jnp.sum(cnt))
    cost = pl.CostEstimate(
        flops=2 * nnz * tile_m * tile_k * h_p + 2 * n_p * h_p * o_p,
        transcendentals=0,
        bytes_accessed=int(nnz * tile_m * tile_k * 2 + n_p * h_p * 2
                           + h_p * o_p * 2 + h_p * 4 + n_p * o_p * 2),
    )
    kernel = functools.partial(_agg_fused_kernel, tile_k=tile_k, max_s=max_s)
    return pl.pallas_call(
        kernel,
        out_shape=jax.ShapeDtypeStruct((n_p, o_p), jnp.bfloat16),
        grid_spec=pltpu.PrefetchScalarGridSpec(
            num_scalar_prefetch=2,
            grid=(n_p // tile_m, max_s),
            in_specs=[
                pl.BlockSpec((tile_m, tile_k),
                             lambda i, s, cnt, ids: (i, ids[i * max_s + s])),
                pl.BlockSpec((n_p, h_p), lambda i, s, cnt, ids: (0, 0)),  # Z1
                pl.BlockSpec((1, h_p), lambda i, s, cnt, ids: (0, 0)),    # b1
                pl.BlockSpec((h_p, o_p), lambda i, s, cnt, ids: (0, 0)),  # W2
            ],
            out_specs=pl.BlockSpec((tile_m, o_p),
                                   lambda i, s, cnt, ids: (i, 0)),
            scratch_shapes=[pltpu.VMEM((tile_m, h_p), jnp.float32)],
        ),
        compiler_params=pltpu.CompilerParams(
            dimension_semantics=("parallel", "arbitrary"),
            vmem_limit_bytes=_VMEM_LIMIT,
        ),
        cost_estimate=cost,
    )(cnt, ids, a, z, b1, w2)


# --------------------------------------------------------------------------
# Kernel 3: layer-2 aggregate  out = A_hat @ Z2 + b2  (f32 output).
# Accumulates directly into the resident f32 output block (no scratch).
# --------------------------------------------------------------------------
def _agg_out_kernel(cnt_ref, ids_ref, a_ref, z_ref, b_ref, o_ref, *,
                    tile_k, max_s):
    i = pl.program_id(0)
    s = pl.program_id(1)

    @pl.when(s == 0)
    def _():
        o_ref[...] = jnp.zeros_like(o_ref)

    @pl.when(s < cnt_ref[i])
    def _():
        kt = ids_ref[i * max_s + s]
        off = pl.multiple_of(kt * tile_k, tile_k)
        o_ref[...] += jnp.dot(
            a_ref[...], z_ref[pl.ds(off, tile_k), :],
            preferred_element_type=jnp.float32)

    @pl.when(s == pl.num_programs(1) - 1)
    def _():
        o_ref[...] += b_ref[...]


def _gcn_aggregate_out(cnt, ids, a, z, b, *, tile_m, tile_k, max_s):
    n_p = a.shape[0]
    o_p = z.shape[1]
    nnz = int(jnp.sum(cnt))
    cost = pl.CostEstimate(
        flops=2 * nnz * tile_m * tile_k * o_p,
        transcendentals=0,
        bytes_accessed=int(nnz * tile_m * tile_k * 2 + n_p * o_p * 2
                           + o_p * 4 + n_p * o_p * 4),
    )
    kernel = functools.partial(_agg_out_kernel, tile_k=tile_k, max_s=max_s)
    return pl.pallas_call(
        kernel,
        out_shape=jax.ShapeDtypeStruct((n_p, o_p), jnp.float32),
        grid_spec=pltpu.PrefetchScalarGridSpec(
            num_scalar_prefetch=2,
            grid=(n_p // tile_m, max_s),
            in_specs=[
                pl.BlockSpec((tile_m, tile_k),
                             lambda i, s, cnt, ids: (i, ids[i * max_s + s])),
                pl.BlockSpec((n_p, o_p), lambda i, s, cnt, ids: (0, 0)),  # Z2
                pl.BlockSpec((1, o_p), lambda i, s, cnt, ids: (0, 0)),    # b2
            ],
            out_specs=pl.BlockSpec((tile_m, o_p),
                                   lambda i, s, cnt, ids: (i, 0)),
        ),
        compiler_params=pltpu.CompilerParams(
            dimension_semantics=("parallel", "arbitrary"),
            vmem_limit_bytes=_VMEM_LIMIT,
        ),
        cost_estimate=cost,
    )(cnt, ids, a, z, b)


# --------------------------------------------------------------------------
# Forward wrapper: padding, bf16 casts, sparsity metadata, layer composition.
# --------------------------------------------------------------------------
def social_gnn_forward(x, edge_index, w1, b1, w2, b2, *, max_tile=_MAX_TILE):
    n, f = x.shape
    hdim, odim = w1.shape[1], w2.shape[1]
    n_p, tile_m, tile_k = _pick_tiles(n, max_tile)
    f_p = _round_up(f, 128)
    h_p = _round_up(hdim, 128)
    o_p = _round_up(odim, 128)

    # Normalized adjacency built directly at padded shape, in bf16 (one pass).
    a_p = build_normalized_adjacency(edge_index, n, n_p)

    # Host-side sparsity metadata (scalar-prefetched into SMEM by the kernels).
    cnt, ids, max_s = _tile_occupancy(a_p, tile_m, tile_k)

    x_p = _pad2(x, (n_p, f_p)).astype(jnp.bfloat16)
    w1_p = _pad2(w1, (f_p, h_p)).astype(jnp.bfloat16)
    w2_p = _pad2(w2, (h_p, o_p)).astype(jnp.bfloat16)
    b1_p = _pad2(b1, (1, h_p)).astype(jnp.float32)
    b2_p = _pad2(b2, (1, o_p)).astype(jnp.float32)

    # Layer 1 feature transform: Z1 = X @ W1
    z1 = _feature_transform(x_p, w1_p, tile_m=tile_m)
    # Layer 1 aggregate + ReLU fused with layer-2 transform:
    #   Z2 = relu(A_hat @ Z1 + b1) @ W2
    z2 = _gcn_aggregate_fused(cnt, ids, a_p, z1, b1_p, w2_p,
                              tile_m=tile_m, tile_k=tile_k, max_s=max_s)
    # Layer 2 aggregate: out = A_hat @ Z2 + b2
    out = _gcn_aggregate_out(cnt, ids, a_p, z2, b2_p,
                             tile_m=tile_m, tile_k=tile_k, max_s=max_s)
    return out[:n, :odim]


def glorot(key, shape):
    fan_in, fan_out = shape
    limit = jnp.sqrt(6.0 / (fan_in + fan_out))
    return jax.random.uniform(key, shape, jnp.float32, -limit, limit)


def _reference_forward(x, edge_index, w1, b1, w2, b2):
    """Plain-JAX reference with the same bf16-input / f32-accumulate path."""
    n = x.shape[0]
    a = build_normalized_adjacency(edge_index, n)   # bf16, unpadded
    xb = x.astype(jnp.bfloat16)
    z1 = jnp.dot(xb, w1.astype(jnp.bfloat16),
                 preferred_element_type=jnp.float32).astype(jnp.bfloat16)
    h = jnp.maximum(jnp.dot(a, z1, preferred_element_type=jnp.float32) + b1,
                    0.0).astype(jnp.bfloat16)
    z2 = jnp.dot(h, w2.astype(jnp.bfloat16),
                 preferred_element_type=jnp.float32).astype(jnp.bfloat16)
    return jnp.dot(a, z2, preferred_element_type=jnp.float32) + b2


if __name__ == "__main__":
    # Small shapes consistent with the module's forward:
    #   x: (num_nodes, num_of_feat), edge_index: (2, num_edges)
    num_nodes = 16
    num_of_feat = 8
    hidden_layer = 32
    num_class = 3          # -> second layer outputs num_class + 1 = 4
    num_edges = 40

    key = jax.random.PRNGKey(0)
    kx, ke_src, ke_tgt, kw1, kw2 = jax.random.split(key, 5)

    x = jax.random.normal(kx, (num_nodes, num_of_feat), jnp.float32)
    edge_index = jnp.stack(
        [
            jax.random.randint(ke_src, (num_edges,), 0, num_nodes, jnp.int32),
            jax.random.randint(ke_tgt, (num_edges,), 0, num_nodes, jnp.int32),
        ],
        axis=0,
    )

    # GCNConv parameter init: glorot weight, zero bias.
    w1 = glorot(kw1, (num_of_feat, hidden_layer))
    b1 = jnp.zeros((1, hidden_layer), jnp.float32)
    w2 = glorot(kw2, (hidden_layer, num_class + 1))
    b2 = jnp.zeros((1, num_class + 1), jnp.float32)

    out = social_gnn_forward(x, edge_index, w1, b1, w2, b2)
    out = jax.block_until_ready(out)

    out_ref = _reference_forward(x, edge_index, w1, b1, w2, b2)
    assert out.shape == (num_nodes, num_class + 1)
    max_err = float(jnp.max(jnp.abs(out - out_ref)))
    assert jnp.allclose(out, out_ref, atol=5e-3, rtol=5e-3), max_err

    print("KERNEL_OK")
</pallas_src>

<mosaic_0001>
module attributes {stable_mosaic.version = 11 : i64} {
  func.func @_feature_transform_kernel(%arg0: i32, %arg1: memref<8x128xbf16, #tpu.memory_space<vmem>>, %arg2: memref<128x128xbf16, #tpu.memory_space<vmem>>, %arg3: memref<8x128xbf16, #tpu.memory_space<vmem>>) attributes {dimension_semantics = [#tpu.dimension_semantics<parallel>], iteration_bounds = array<i64: 2>, scalar_prefetch = 0 : i64, scratch_operands = 0 : i64, tpu.core_type = #tpu.core_type<tc>, window_params = [{transform_indices = @transform_0, window_bounds = array<i64: 8, 128>}, {pipeline_mode = #tpu.pipeline_mode<synchronous>, transform_indices = @transform_1, window_bounds = array<i64: 128, 128>}, {transform_indices = @transform_2, window_bounds = array<i64: 8, 128>}]} {
    %c0 = arith.constant 0 : index
    %c0_0 = arith.constant 0 : index
    %0 = vector.load %arg1[%c0, %c0_0] : memref<8x128xbf16, #tpu.memory_space<vmem>>, vector<8x128xbf16>
    %c0_1 = arith.constant 0 : index
    %c0_2 = arith.constant 0 : index
    %1 = vector.load %arg2[%c0_1, %c0_2] : memref<128x128xbf16, #tpu.memory_space<vmem>>, vector<128x128xbf16>
    %cst = arith.constant dense<0.000000e+00> : vector<8x128xf32>
    %2 = tpu.matmul %0, %1, %cst {dimension_numbers = #tpu.dot_dimension_numbers<[1], [0], [0], [1], [0, 0, 1, 1], [], []>} : vector<8x128xbf16>, vector<128x128xbf16>, vector<8x128xf32> -> vector<8x128xf32>
    %3 = arith.truncf %2 : vector<8x128xf32> to vector<8x128xbf16>
    %c0_3 = arith.constant 0 : index
    %c0_4 = arith.constant 0 : index
    %4 = vector.load %arg3[%c0_3, %c0_4] : memref<8x128xbf16, #tpu.memory_space<vmem>>, vector<8x128xbf16>
    tpu.vector_store %arg3[%c0_3, %c0_4], %3 {strides = array<i32>} : memref<8x128xbf16, #tpu.memory_space<vmem>>, vector<8x128xbf16>,
    return
  }
  func.func @transform_0(%arg0: i32) -> (i32, i32) {
    %c0_i32 = arith.constant 0 : i32
    %c0_i32_0 = arith.constant 0 : i32
    return %arg0, %c0_i32 : i32, i32
  }
  func.func @transform_1(%arg0: i32) -> (i32, i32) {
    %c0_i32 = arith.constant 0 : i32
    %c0_i32_0 = arith.constant 0 : i32
    %c0_i32_1 = arith.constant 0 : i32
    return %c0_i32, %c0_i32_0 : i32, i32
  }
  func.func @transform_2(%arg0: i32) -> (i32, i32) {
    %c0_i32 = arith.constant 0 : i32
    %c0_i32_0 = arith.constant 0 : i32
    return %arg0, %c0_i32 : i32, i32
  }
}

</mosaic_0001>

<llo_original>
// kernel: tpu_custom_call.1
$region0: #{tpu_custom_call.1}
  #allocation0 [shape = 'u32[]', space=smem, size = 0x4, offset = 0x4, fixed_abs, tag = 'smem constant byte address 0x4 - core index']
  #allocation1 [shape = 'u32[72,128]{1,0:T(1,128)}', space=vmem, size = 0x9000, scoped, tag = 'internal scratch']
  %s0 = inlined_call_operand.hbm [shape: bf16[16,128], index: 0, kind: input, shape index: {}]
  %s1 = inlined_call_operand.hbm [shape: bf16[128,128], index: 1, kind: input, shape index: {}]
  %s2 = inlined_call_operand.hbm [shape: bf16[16,128], index: 2, kind: output, shape index: {}]
  %s3 = sld [smem:[#allocation0]]
  $region49: #{tpu_custom_call.1} parent=0
    _
  %s5 = ssub.s32 1, %s3
  %s6 = scalar_select 0, %s5, %s3
  $region1: #{tpu_custom_call.1} parent=0
    #allocation2 [shape = 'u8[4096]{0}', space=vmem, size = 0x1000, scoped, tag = 'input window, operand 0']
    #allocation3 [shape = 's32[2]{0}', space=sflag, size = 0x8, scoped, tag = 'scoped memory for tpu_custom_call.1']
    #allocation4 [shape = 's32[2]{0}', space=sflag, size = 0x8, scoped, tag = 'scoped memory for tpu_custom_call.1']
    #allocation5 [shape = 'u8[32768]{0}', space=vmem, size = 0x8000, scoped, tag = 'input window, operand 1, single buffered']
    #allocation6 [shape = 's32[1]{0}', space=sflag, size = 0x4, scoped, tag = 'scoped memory for tpu_custom_call.1']
    #allocation7 [shape = 'u8[4096]{0}', space=vmem, size = 0x1000, scoped, tag = 'output window, operand 0']
    %7 = vsyncpa [#allocation3], 0
    %s8 = scalar_lea.sflag [#allocation3], 1
    %9 = vsyncpa %s8, 0
    %10 = vsyncpa [#allocation6], 0
    %11 = vsyncpa [#allocation4], 0
    %s12 = scalar_lea.sflag [#allocation4], 1
    %13 = vsyncpa %s12, 0
    loop: start=0, step=1, limit=4
    $region2: #{tpu_custom_call.1} parent=1 // loop_pre_header
      _
    $region3: #{tpu_custom_call.1} parent=1 // loop_header
      %s15 = sphi 0, %s19
      %p16 = scmp.ge.s32.totalorder %s15, 4
      %s25 = sphi 0, %s27
      %s28 = sphi 0, %s25
      %s29 = sphi 0, %s28
      %s45 = sphi 0, %s29
      %s49 = sphi 0, %s49
      %s51 = sphi 0, %s49
      %s52 = sphi 0, %s51
      %s66 = sphi 0, %s52
      %s72 = sphi 0, %s74
      %s75 = sphi 0, %s72
      %s76 = sphi 0, %s75
      %s92 = sphi 0, %s76
    $region4: #{tpu_custom_call.1} parent=1 // loop_header_branch
      %18 = sbr.rel (%p16) target = $region8
    $region5: #{tpu_custom_call.1} parent=1 // loop_body
      %s20 = ssub.s32 %s15, 1
      %s21 = ssub.s32 %s15, 2
      %s22 = sadd.s32 %s15, 1
      %s23 = ssub.s32 %s15, %s22
      %p24 = scmp.eq.s32.totalorder %s23, 0
      %s26 = sadd.s32 %s25, 1
      %s27 = scalar_select %p24, %s25, %s26
      %p30 = pneg %p24
      %p31 = scmp.eq.s32.totalorder %s15, 1
      %p32 = por %p30, %p31
      %p33 = scmp.ne.s32.totalorder %s25, %s28
      %p34 = scmp.eq.s32.totalorder %s15, 0
      %p35 = por %p33, %p34
      %p36 = scmp.ne.s32.totalorder %s25, %s28
      %p37 = scmp.eq.s32.totalorder %s20, 1
      %p38 = por %p36, %p37
      %p39 = scmp.ne.s32.totalorder %s28, %s29
      %p40 = scmp.eq.s32.totalorder %s20, 0
      %p41 = por %p39, %p40
      %p42 = scmp.ne.s32.totalorder %s28, %s29
      %p43 = scmp.eq.s32.totalorder %s21, 1
      %p44 = por %p42, %p43
      %p46 = scmp.ne.s32.totalorder %s29, %s45
      %p47 = scmp.eq.s32.totalorder %s21, 0
      %p48 = por %p46, %p47
      %s50 = sadd.s32 %s49, 1
      %p53 = scmp.eq.s32.totalorder %s15, 1
      %p54 = scmp.ne.s32.totalorder %s49, %s51
      %p55 = scmp.eq.s32.totalorder %s15, 0
      %p56 = por %p54, %p55
      %p57 = scmp.ne.s32.totalorder %s49, %s51
      %p58 = scmp.eq.s32.totalorder %s20, 1
      %p59 = por %p57, %p58
      %p60 = scmp.ne.s32.totalorder %s51, %s52
      %p61 = scmp.eq.s32.totalorder %s20, 0
      %p62 = por %p60, %p61
      %p63 = scmp.ne.s32.totalorder %s51, %s52
      %p64 = scmp.eq.s32.totalorder %s21, 1
      %p65 = por %p63, %p64
      %p67 = scmp.ne.s32.totalorder %s52, %s66
      %p68 = scmp.eq.s32.totalorder %s21, 0
      %p69 = por %p67, %p68
      %s70 = ssub.s32 %s15, %s22
      %p71 = scmp.eq.s32.totalorder %s70, 0
      %s73 = sadd.s32 %s72, 1
      %s74 = scalar_select %p71, %s72, %s73
      %p77 = pneg %p71
      %p78 = scmp.eq.s32.totalorder %s15, 1
      %p79 = por %p77, %p78
      %p80 = scmp.ne.s32.totalorder %s72, %s75
      %p81 = scmp.eq.s32.totalorder %s15, 0
      %p82 = por %p80, %p81
      %p83 = scmp.ne.s32.totalorder %s72, %s75
      %p84 = scmp.eq.s32.totalorder %s20, 1
      %p85 = por %p83, %p84
      %p86 = scmp.ne.s32.totalorder %s75, %s76
      %p87 = scmp.eq.s32.totalorder %s20, 0
      %p88 = por %p86, %p87
      %p89 = scmp.ne.s32.totalorder %s75, %s76
      %p90 = scmp.eq.s32.totalorder %s21, 1
      %p91 = por %p89, %p90
      %p93 = scmp.ne.s32.totalorder %s76, %s92
      %p94 = scmp.eq.s32.totalorder %s21, 0
      %p95 = por %p93, %p94
      %p96 = scmp.le.s32.totalorder 1, %s15
      %p97 = scmp.lt.s32.totalorder %s15, 3
      %p98 = pnand %p96, %p97
      %p99 = pneg %p98
      // Predicated region
      $region9: #{tpu_custom_call.1} parent=5 // pred_check
        _
      $region10: #{tpu_custom_call.1} parent=5 // pred_check_branch
        %101 = sbr.rel (%p98) target = $region12
      $region11: #{tpu_custom_call.1} parent=5 // pred_region
        %s102 = ssub.s32 %s15, 1
        // Predicated region
        $region13: #{tpu_custom_call.1} parent=11 // pred_check
          %p103 = pneg %p62
        $region14: #{tpu_custom_call.1} parent=11 // pred_check_branch
          %105 = sbr.rel (%p103) target = $region16
        $region15: #{tpu_custom_call.1} parent=11 // pred_region
          %107 = vsyncadd [#allocation6], 0
          %s108 = sshll.u32 %s1, 4
          %s109 = int_to_ptr.hbm [resolvable:$true] %s108
          %s110 = sshll.u32 [#allocation5], 4
          %s111 = int_to_ptr.vmem [resolvable:$true] %s110
          %116 = dma.hbm_to_vmem [thread:$0]  %s109, 1024, %s111, [#allocation6], 64, 64, 4
        $region16: #{tpu_custom_call.1} parent=11 // pred_fallthru
          _
      $region12: #{tpu_custom_call.1} parent=5 // pred_fallthru
        _
      %p117 = scmp.lt.s32.totalorder %s15, 2
      // Predicated region
      $region17: #{tpu_custom_call.1} parent=5 // pred_check
        %p118 = pneg %p117
      $region18: #{tpu_custom_call.1} parent=5 // pred_check_branch
        %120 = sbr.rel (%p118) target = $region20
      $region19: #{tpu_custom_call.1} parent=5 // pred_region
        // Predicated region
        $region21: #{tpu_custom_call.1} parent=19 // pred_check
          %p121 = pneg %p35
        $region22: #{tpu_custom_call.1} parent=19 // pred_check_branch
          %123 = sbr.rel (%p121) target = $region24
        $region23: #{tpu_custom_call.1} parent=19 // pred_region
          %s124 = sand.u32 %s25, 1
          %s125 = scalar_lea.sflag [#allocation3], %s124
          %s126 = sand.u32 %s25, 1
          %s127 = smul.addr %s126, 4
          %s128 = scalar_lea.vmem [#allocation2], %s127
          %130 = vsyncadd %s125, 0
          %s131 = smul.addr %s15, 4
          %s132 = scalar_lea.hbm %s0, %s131
          %s134 = sshll.u32 %s132, 4
          %s135 = int_to_ptr.hbm [resolvable:$true] %s134
          %s136 = sshll.u32 %s128, 4
          %s137 = int_to_ptr.vmem [resolvable:$true] %s136
          %139 = dma.hbm_to_vmem [thread:$0]  %s135, 64, %s137, %s125
        $region24: #{tpu_custom_call.1} parent=19 // pred_fallthru
          _
      $region20: #{tpu_custom_call.1} parent=5 // pred_fallthru
        _
      %p140 = scmp.le.s32.totalorder 1, %s15
      %p141 = scmp.lt.s32.totalorder %s15, 3
      %p142 = pnand %p140, %p141
      %p143 = pneg %p142
      // Predicated region
      $region25: #{tpu_custom_call.1} parent=5 // pred_check
        _
      $region26: #{tpu_custom_call.1} parent=5 // pred_check_branch
        %145 = sbr.rel (%p142) target = $region28
      $region27: #{tpu_custom_call.1} parent=5 // pred_region
        %s146 = ssub.s32 %s15, 1
        %s147 = sand.u32 %s28, 1
        %s148 = scalar_lea.sflag [#allocation3], %s147
        %s149 = sand.u32 %s28, 1
        %s150 = smul.addr %s149, 4
        %s151 = scalar_lea.vmem [#allocation2], %s150
        // Predicated region
        $region29: #{tpu_custom_call.1} parent=27 // pred_check
          %p152 = pneg %p41
        $region30: #{tpu_custom_call.1} parent=27 // pred_check_branch
          %154 = sbr.rel (%p152) target = $region32
        $region31: #{tpu_custom_call.1} parent=27 // pred_region
          %156 = dma.done %s148, 64
        $region32: #{tpu_custom_call.1} parent=27 // pred_fallthru
          _
        // Predicated region
        $region33: #{tpu_custom_call.1} parent=27 // pred_check
          %p157 = pneg %p62
        $region34: #{tpu_custom_call.1} parent=27 // pred_check_branch
          %159 = sbr.rel (%p157) target = $region36
        $region35: #{tpu_custom_call.1} parent=27 // pred_region
          %161 = dma.done [#allocation6], 1024
        $region36: #{tpu_custom_call.1} parent=27 // pred_fallthru
          _
        %s162 = sand.u32 %s28, 1
        %s163 = scalar_lea.sflag [#allocation3], %s162
        %s164 = sand.u32 %s28, 1
        %s165 = smul.addr %s164, 4
        %s166 = scalar_lea.vmem [#allocation2], %s165
        %p167 = pneg %p41
        %p168 = pneg %p38
        %p169 = pneg %p62
        %p170 = pneg %p59
        %p171 = pneg %p88
        %p172 = pneg %p85
        %s173 = sand.u32 %s75, 1
        %s174 = scalar_lea.sflag [#allocation4], %s173
        %s175 = sand.u32 %s75, 1
        %s176 = smul.addr %s175, 4
        %s177 = scalar_lea.vmem [#allocation7], %s176
        %v178 = vld [vmem:[%s151] sm:$0xf]
        %v179 = vld [vmem:[#allocation5] sm:$0xf]
        %v180 = vld [vmem:[#allocation5 + $0x4] sm:$0xf]
        %v181 = vld [vmem:[#allocation5 + $0x8] sm:$0xf]
        %v182 = vld [vmem:[#allocation5 + $0xc] sm:$0xf]
        %v183 = vld [vmem:[#allocation5 + $0x10] sm:$0xf]
        %v184 = vld [vmem:[#allocation5 + $0x14] sm:$0xf]
        %v185 = vld [vmem:[#allocation5 + $0x18] sm:$0xf]
        %v186 = vld [vmem:[#allocation5 + $0x1c] sm:$0xf]
        %v187 = vld [vmem:[#allocation5 + $0x20] sm:$0xf]
        %v188 = vld [vmem:[#allocation5 + $0x24] sm:$0xf]
        %v189 = vld [vmem:[#allocation5 + $0x28] sm:$0xf]
        %v190 = vld [vmem:[#allocation5 + $0x2c] sm:$0xf]
        %v191 = vld [vmem:[#allocation5 + $0x30] sm:$0xf]
        %v192 = vld [vmem:[#allocation5 + $0x34] sm:$0xf]
        %v193 = vld [vmem:[#allocation5 + $0x38] sm:$0xf]
        %v194 = vld [vmem:[#allocation5 + $0x3c] sm:$0xf]
        %v211 = vunpack.c.l.b16 %v179
        %v212 = vunpack.c.l.b16 %v180
        %v213 = vunpack.c.l.b16 %v181
        %v214 = vunpack.c.l.b16 %v182
        %v215 = vunpack.c.l.b16 %v183
        %v216 = vunpack.c.l.b16 %v184
        %v217 = vunpack.c.l.b16 %v185
        %v218 = vunpack.c.l.b16 %v186
        %v219 = vunpack.c.l.b16 %v187
        %v220 = vunpack.c.l.b16 %v188
        %v221 = vunpack.c.l.b16 %v189
        %v222 = vunpack.c.l.b16 %v190
        %v223 = vunpack.c.l.b16 %v191
        %v224 = vunpack.c.l.b16 %v192
        %v225 = vunpack.c.l.b16 %v193
        %v226 = vunpack.c.l.b16 %v194
        %v227 = vpack.c.b16 %v212, %v211
        %v228 = vpack.c.b16 %v214, %v213
        %v229 = vpack.c.b16 %v216, %v215
        %v230 = vpack.c.b16 %v218, %v217
        %v231 = vpack.c.b16 %v220, %v219
        %v232 = vpack.c.b16 %v222, %v221
        %v233 = vpack.c.b16 %v224, %v223
        %v234 = vpack.c.b16 %v226, %v225
        %243 = vmatpush.bf16.msra.mxu0 %v234
        %244 = vmatpush.bf16.msra.mxu0 %v233
        %245 = vmatpush.bf16.msra.mxu0 %v232
        %246 = vmatpush.bf16.msra.mxu0 %v231
        %247 = vmatpush.bf16.msra.mxu0 %v230
        %248 = vmatpush.bf16.msra.mxu0 %v229
        %249 = vmatpush.bf16.msra.mxu0 %v228
        %250 = vmatpush.bf16.msra.mxu0 %v227
        %251 = vmatmul.bf16.gmra.mxu0 %v178
        %v252 = vpop.f32.mrf.mxu0
        %v253 = vadd.f32 0.0, %v252
        %v254 = vpop.f32.mrf.mxu0
        %255 = vdwg.mxu0
        %v256 = vpack.c.bf16 %v253, %v253
        %257 = vst [vmem:[%s177] sm:$0xf] %v256
        %s258 = sand.u32 %s75, 1
        %s259 = scalar_lea.sflag [#allocation4], %s258
        %s260 = sand.u32 %s75, 1
        %s261 = smul.addr %s260, 4
        %s262 = scalar_lea.vmem [#allocation7], %s261
        // Predicated region
        $region37: #{tpu_custom_call.1} parent=27 // pred_check
          %p263 = pneg %p85
        $region38: #{tpu_custom_call.1} parent=27 // pred_check_branch
          %265 = sbr.rel (%p263) target = $region40
        $region39: #{tpu_custom_call.1} parent=27 // pred_region
          %267 = vsyncadd %s259, 0
          %s268 = smul.addr %s20, 4
          %s269 = scalar_lea.hbm %s2, %s268
          %s271 = sshll.u32 %s262, 4
          %s272 = int_to_ptr.vmem [resolvable:$true] %s271
          %s273 = sshll.u32 %s269, 4
          %s274 = int_to_ptr.hbm [resolvable:$true] %s273
          %276 = dma.vmem_to_hbm [thread:$0]  %s272, 64, %s274, %s259
        $region40: #{tpu_custom_call.1} parent=27 // pred_fallthru
          _
      $region28: #{tpu_custom_call.1} parent=5 // pred_fallthru
        _
      %p277 = scmp.le.s32.totalorder 2, %s15
      // Predicated region
      $region41: #{tpu_custom_call.1} parent=5 // pred_check
        %p278 = pneg %p277
      $region42: #{tpu_custom_call.1} parent=5 // pred_check_branch
        %280 = sbr.rel (%p278) target = $region44
      $region43: #{tpu_custom_call.1} parent=5 // pred_region
        %s281 = ssub.s32 %s15, 2
        // Predicated region
        $region45: #{tpu_custom_call.1} parent=43 // pred_check
          %p282 = pneg %p91
        $region46: #{tpu_custom_call.1} parent=43 // pred_check_branch
          %284 = sbr.rel (%p282) target = $region48
        $region47: #{tpu_custom_call.1} parent=43 // pred_region
          %s285 = sand.u32 %s76, 1
          %s286 = scalar_lea.sflag [#allocation4], %s285
          %s287 = sand.u32 %s76, 1
          %s288 = smul.addr %s287, 4
          %s289 = scalar_lea.vmem [#allocation7], %s288
          %291 = dma.done %s286, 64
        $region48: #{tpu_custom_call.1} parent=43 // pred_fallthru
          _
      $region44: #{tpu_custom_call.1} parent=5 // pred_fallthru
        _
    $region6: #{tpu_custom_call.1} parent=1 // loop_footer
      %s19 = sadd.s32 1, %s15
    $region7: #{tpu_custom_call.1} parent=1 // loop_footer_branch
      %14 = sbr.rel target = $region3
    $region8: #{tpu_custom_call.1} parent=1 // loop_exit
      _
    %292 = vsyncpa [#allocation3], 1
    %s293 = scalar_lea.sflag [#allocation3], 1
    %294 = vsyncpa %s293, 1
    %295 = vsyncpa [#allocation6], 1
    %296 = vsyncpa [#allocation4], 1
    %s297 = scalar_lea.sflag [#allocation4], 1
    %298 = vsyncpa %s297, 1

</llo_original>
